<compile_context>
chip_gen: v7x
topology: tpu7x:2x2x1
jax: 0.10.0
libtpu: 0.0.40
codegen_flags: <defaults>
</compile_context>

<pallas_src>
import functools

import jax
import jax.numpy as jnp
from jax.experimental import pallas as pl
from jax.experimental.pallas import tpu as pltpu


def _round_up(a, b):
    return ((a + b - 1) // b) * b


def _pick_row_tile(n_rows, max_tile, multiple, prefer_steps=2):
    """Largest divisor of n_rows that is a multiple of `multiple` and <= max_tile.

    Prefers a tile that yields >= prefer_steps grid steps (keeps v7x's two TensorCores
    busy and enables double-buffer pipelining).  Falls back to padding n_rows when no
    clean divisor exists.  Returns (tile, padded_rows)."""
    max_tile = max(multiple, (max_tile // multiple) * multiple)
    cap = min(max_tile, n_rows)
    divs = [d for d in range(multiple, cap + 1, multiple) if n_rows % d == 0]
    multi = [d for d in divs if n_rows // d >= prefer_steps]
    if multi:
        return max(multi), n_rows
    if divs:
        return max(divs), n_rows
    tile = min(max_tile, _round_up(n_rows, multiple))
    return tile, _round_up(n_rows, tile)


# ------------------------------------------------------------------
# Kernel 1: patch-embedding matmul   out_tile = patches_tile @ W_T + bias
# ------------------------------------------------------------------
def _stem_matmul_kernel(p_ref, w_ref, b_ref, o_ref):
    # p_ref: (tm, K)   patch tile        (bf16 or f32; K = full contraction dim, unpadded)
    # w_ref: (K, Np)   transposed weight (resident across the grid)
    # b_ref: (1, Np)   bias              (f32 epilogue — v5e-friendly)
    # o_ref: (tm, Np)  output tile       (bf16 by default: halves HBM writeback)
    acc = jnp.dot(p_ref[...], w_ref[...], preferred_element_type=jnp.float32)
    o_ref[...] = (acc + b_ref[...]).astype(o_ref.dtype)


def _extract_patches(x, p):
    """Non-overlapping tubelet patches (kernel == stride, no padding => no inflation).

    x: (B, C, T, H, W) -> (B*T*Ho*Wo, C*p*p)
    Row order (b, t, ho, wo) matches conv.reshape(B, dim, -1).permute(0, 2, 1);
    K order (C, ph, pw) matches the PyTorch Conv3d weight layout (dim, C, 1, p, p).
    """
    B, C, T, H, W = x.shape
    Ho, Wo = H // p, W // p
    xr = x.reshape(B, C, T, Ho, p, Wo, p)
    xr = jnp.transpose(xr, (0, 2, 3, 5, 1, 4, 6))          # (B, T, Ho, Wo, C, p, p)
    return xr.reshape(B * T * Ho * Wo, C * p * p), (T, Ho, Wo)


def patch_embed_stem(x, weight, bias, *, patch_size, tm=512,
                     mxu_dtype=jnp.bfloat16, out_dtype=jnp.bfloat16):
    """
    x:      (B, C, T, H, W)            float32 (NCDHW)
    weight: (dim, C, 1, p, p)          float32 (PyTorch Conv3d layout)
    bias:   (dim,)                     float32
    returns (B, T*Ho*Wo, Np)           out_dtype, Np = round_up(dim, 128);
                                       columns >= dim are exactly zero.
    """
    B, C, T, H, W = x.shape
    p = patch_size
    dim = weight.shape[0]
    assert H % p == 0 and W % p == 0, "H/W must be divisible by patch size"

    patches, (To, Ho, Wo) = _extract_patches(x, p)
    M, K = patches.shape
    Np = _round_up(dim, 128)                              # lane-dense output columns

    sub = 16 if jnp.dtype(mxu_dtype).itemsize == 2 else 8
    tm_eff, Mp = _pick_row_tile(M, tm, sub)               # usually a divisor of M: no pad

    # Single producer pass: optional M-pad + dtype cast.  K stays unpadded (block last
    # dim == full array dim), so no zero MXU work is added when K % 128 != 0.
    if Mp != M:
        patches = jnp.pad(patches, ((0, Mp - M), (0, 0)))
    patches = patches.astype(mxu_dtype)

    w_t = weight.reshape(dim, K).T                        # (K, dim), tiny
    w_t = jnp.pad(w_t, ((0, 0), (0, Np - dim))).astype(mxu_dtype)
    b2 = jnp.pad(bias.astype(jnp.float32), (0, Np - dim)).reshape(1, Np)

    itm = jnp.dtype(mxu_dtype).itemsize
    oitm = jnp.dtype(out_dtype).itemsize
    cost = pl.CostEstimate(
        flops=2 * Mp * K * Np,
        transcendentals=0,
        bytes_accessed=Mp * K * itm + K * Np * itm + Np * 4 + Mp * Np * oitm,
    )

    out = pl.pallas_call(
        _stem_matmul_kernel,
        out_shape=jax.ShapeDtypeStruct((Mp, Np), out_dtype),
        grid_spec=pltpu.PrefetchScalarGridSpec(
            num_scalar_prefetch=0,
            grid=(Mp // tm_eff,),
            in_specs=[
                pl.BlockSpec((tm_eff, K), lambda i: (i, 0)),
                pl.BlockSpec((K, Np), lambda i: (0, 0)),
                pl.BlockSpec((1, Np), lambda i: (0, 0)),
            ],
            out_specs=pl.BlockSpec((tm_eff, Np), lambda i: (i, 0)),
        ),
        compiler_params=pltpu.CompilerParams(
            dimension_semantics=("parallel",),
            # Let XLA fuse the im2col transpose / pad / cast producers into the call
            # instead of materializing the (M, K) patch matrix extra times in HBM.
            allow_input_fusion=[True, True, True]),
        cost_estimate=cost,
    )(patches, w_t, b2)

    if Mp != M:
        out = out[:M]
    return out.reshape(B, To * Ho * Wo, Np)


# ------------------------------------------------------------------
# Kernel 2 (fused): pos-embed add + LayerNorm for token rows, plus the cls row
# (cls_token + pos[0], identical across batch) as a second tiny output.
# ------------------------------------------------------------------
def _pos_ln_kernel(tok_ref, pos_ref, cls_ref, cpos_ref, g_ref, b_ref,
                   otok_ref, ocls_ref, *, eps, inv_d):
    g = g_ref[...]
    b = b_ref[...]

    # Token rows: add positional embedding, LayerNorm over the (zero-padded) feature dim.
    # Pad columns are exactly zero, so sums over Np equal sums over the true D; dividing
    # by the true D (inv_d) keeps mean/var unbiased.
    x = tok_ref[...].astype(jnp.float32) + pos_ref[...].astype(jnp.float32)
    mean = jnp.sum(x, axis=-1, keepdims=True) * inv_d
    var = jnp.sum(x * x, axis=-1, keepdims=True) * inv_d - mean * mean
    inv = jax.lax.rsqrt(var + eps)
    otok_ref[...] = ((x - mean) * inv * g + b).astype(otok_ref.dtype)

    # cls row (f32 inputs, batch-independent): write once on the first grid step.
    @pl.when((pl.program_id(0) == 0) & (pl.program_id(1) == 0))
    def _():
        xc = cls_ref[...].astype(jnp.float32) + cpos_ref[...].astype(jnp.float32)
        mc = jnp.sum(xc, axis=-1, keepdims=True) * inv_d
        vc = jnp.sum(xc * xc, axis=-1, keepdims=True) * inv_d - mc * mc
        ocls_ref[...] = ((xc - mc) * jax.lax.rsqrt(vc + eps) * g + b).astype(ocls_ref.dtype)


def fused_pos_layernorm(tokens, cls_tok, pos, gamma, beta, *, true_dim,
                        eps=1e-6, ts=512):
    """tokens: (B, S, Np) with zero pad columns; cls_tok (1,1,D); pos (1,S+1,D);
    gamma/beta (D,).  Returns (norm_tokens (B,S,Np) f32, norm_cls (1,1,Np) f32)."""
    B, S, Np = tokens.shape
    D = true_dim
    padD = Np - D

    pos_p = jnp.pad(pos.astype(jnp.float32), ((0, 0), (0, 0), (0, padD)))
    pos_cls = pos_p[:, :1]                                    # (1, 1, Np) f32 (tiny)
    pos_tok = pos_p[:, 1:].astype(tokens.dtype)               # (1, S, Np) bf16
    cls_p = jnp.pad(cls_tok.astype(jnp.float32), ((0, 0), (0, 0), (0, padD)))
    g_p = jnp.pad(gamma.astype(jnp.float32), (0, padD)).reshape(1, 1, Np)
    b_p = jnp.pad(beta.astype(jnp.float32), (0, padD)).reshape(1, 1, Np)

    ts_eff, Sp = _pick_row_tile(S, ts, 16)
    if Sp != S:
        tokens = jnp.pad(tokens, ((0, 0), (0, Sp - S), (0, 0)))
        pos_tok = jnp.pad(pos_tok, ((0, 0), (0, Sp - S), (0, 0)))

    kern = functools.partial(_pos_ln_kernel, eps=eps, inv_d=1.0 / D)
    otok, ocls = pl.pallas_call(
        kern,
        out_shape=(jax.ShapeDtypeStruct((B, Sp, Np), jnp.float32),
                   jax.ShapeDtypeStruct((1, 1, Np), jnp.float32)),
        grid=(B, Sp // ts_eff),
        in_specs=[
            pl.BlockSpec((1, ts_eff, Np), lambda b, j: (b, j, 0)),   # tokens
            pl.BlockSpec((1, ts_eff, Np), lambda b, j: (0, j, 0)),   # pos (token rows)
            pl.BlockSpec((1, 1, Np), lambda b, j: (0, 0, 0)),        # cls token
            pl.BlockSpec((1, 1, Np), lambda b, j: (0, 0, 0)),        # pos row 0
            pl.BlockSpec((1, 1, Np), lambda b, j: (0, 0, 0)),        # gamma
            pl.BlockSpec((1, 1, Np), lambda b, j: (0, 0, 0)),        # beta
        ],
        out_specs=(pl.BlockSpec((1, ts_eff, Np), lambda b, j: (b, j, 0)),
                   pl.BlockSpec((1, 1, Np), lambda b, j: (0, 0, 0))),
        # The cls output block index is constant across both grid axes, so both axes are
        # marked "arbitrary" (measured cost of arbitrary vs parallel is ~0 for mem-bound
        # elementwise kernels).
        compiler_params=pltpu.CompilerParams(
            dimension_semantics=("arbitrary", "arbitrary")),
    )(tokens, pos_tok, cls_p, pos_cls, g_p, b_p)

    if Sp != S:
        otok = otok[:, :S]
    return otok, ocls


# ------------------------------------------------------------------
# Full forward (use_cls_token=True, finetune path)
# ------------------------------------------------------------------
def transformer_forward(x, params, *, patch_size, tm=512, ts=512,
                        mxu_dtype=jnp.bfloat16, return_sequence=False):
    dim = params["conv_w"].shape[0]
    tokens = patch_embed_stem(x, params["conv_w"], params["conv_b"],
                              patch_size=patch_size, tm=tm, mxu_dtype=mxu_dtype,
                              out_dtype=jnp.bfloat16)          # (B, S, Np) bf16
    B = tokens.shape[0]
    # TODO(synk): self.layers (depth x BRANCH_REGISTRY blocks) undefined in spec -> identity.
    otok, ocls = fused_pos_layernorm(
        tokens, params["cls_token"], params["pos_embd"],
        params["ln_gamma"], params["ln_beta"], true_dim=dim, ts=ts)
    if return_sequence:
        cls_rows = jnp.broadcast_to(ocls[:, :, :dim], (B, 1, dim))
        return jnp.concatenate([cls_rows, otok[:, :, :dim]], axis=1)
    # use_cls_token=True pooling: x[:, 0] (cls row is batch-independent here).
    return jnp.broadcast_to(ocls[0, :, :dim], (B, dim))


# ------------------------------------------------------------------
# Pure-JAX reference (XLA conv) for correctness checks
# ------------------------------------------------------------------
def _reference_stem(x, weight, bias, *, patch_size):
    y = jax.lax.conv_general_dilated(
        x, weight, window_strides=(1, patch_size, patch_size), padding="VALID",
        dimension_numbers=("NCDHW", "OIDHW", "NCDHW"),
        preferred_element_type=jnp.float32)
    y = y + bias[None, :, None, None, None]
    B, D = y.shape[0], y.shape[1]
    return jnp.transpose(y.reshape(B, D, -1), (0, 2, 1))


def _reference_forward(x, params, *, patch_size, return_sequence=False):
    tokens = _reference_stem(x, params["conv_w"], params["conv_b"],
                             patch_size=patch_size)
    B, N, D = tokens.shape
    cls = jnp.broadcast_to(params["cls_token"], (B, 1, D))
    xc = jnp.concatenate([cls, tokens], axis=1) + params["pos_embd"]
    mean = xc.mean(-1, keepdims=True)
    var = ((xc - mean) ** 2).mean(-1, keepdims=True)
    y = (xc - mean) * jax.lax.rsqrt(var + 1e-6) * params["ln_gamma"] + params["ln_beta"]
    return y if return_sequence else y[:, 0]


if __name__ == "__main__":
    # Small ViT-video config: 3-channel video, 8 frames, 16x16 crop, patch 8, dim 32.
    B, C, T, H, W = 2, 3, 8, 16, 16
    patch_size = 8
    dim = 32
    S = T * (H // patch_size) * (W // patch_size)         # 32 tokens

    key = jax.random.PRNGKey(0)
    kx, kw, kb, kc, kp, kg, kbe = jax.random.split(key, 7)
    x = jax.random.normal(kx, (B, C, T, H, W), jnp.float32)

    fan_in = C * patch_size * patch_size
    bound = 1.0 / (fan_in ** 0.5)
    conv_w = jax.random.uniform(kw, (dim, C, 1, patch_size, patch_size),
                                jnp.float32, -bound, bound)
    conv_b = jax.random.uniform(kb, (dim,), jnp.float32, -bound, bound)
    params = dict(
        conv_w=conv_w, conv_b=conv_b,
        cls_token=0.02 * jax.random.normal(kc, (1, 1, dim), jnp.float32),
        pos_embd=0.02 * jax.random.normal(kp, (1, S + 1, dim), jnp.float32),
        ln_gamma=1.0 + 0.1 * jax.random.normal(kg, (dim,), jnp.float32),
        ln_beta=0.05 * jax.random.normal(kbe, (dim,), jnp.float32),
    )

    stem_ref = jax.block_until_ready(
        _reference_stem(x, conv_w, conv_b, patch_size=patch_size))

    # --- 1) stem kernel, f32 MXU operands + f32 output: tight check vs XLA conv ---
    stem_f32 = jax.jit(functools.partial(
        patch_embed_stem, patch_size=patch_size,
        mxu_dtype=jnp.float32, out_dtype=jnp.float32))(x, conv_w, conv_b)
    stem_f32 = jax.block_until_ready(stem_f32)
    assert stem_f32.shape == (B, S, 128), stem_f32.shape
    assert jnp.allclose(stem_f32[..., :dim], stem_ref, atol=1e-2, rtol=1e-2), \
        float(jnp.max(jnp.abs(stem_f32[..., :dim] - stem_ref)))
    assert jnp.all(stem_f32[..., dim:] == 0.0)            # pad columns must stay zero

    # --- 2) stem kernel, bf16 operands + bf16 output (default): loose check ---
    stem_bf16 = jax.jit(functools.partial(
        patch_embed_stem, patch_size=patch_size))(x, conv_w, conv_b)
    stem_bf16 = jax.block_until_ready(stem_bf16)
    assert stem_bf16.dtype == jnp.bfloat16
    assert jnp.allclose(stem_bf16[..., :dim].astype(jnp.float32), stem_ref,
                        atol=5e-2, rtol=5e-2), \
        float(jnp.max(jnp.abs(stem_bf16[..., :dim].astype(jnp.float32) - stem_ref)))

    # --- 3) full forward: normalized sequence (exercises stem + fused pos-add/LN) ---
    seq = jax.jit(functools.partial(
        transformer_forward, patch_size=patch_size, return_sequence=True))(x, params)
    seq = jax.block_until_ready(seq)
    seq_ref = _reference_forward(x, params, patch_size=patch_size,
                                 return_sequence=True)
    assert seq.shape == seq_ref.shape, (seq.shape, seq_ref.shape)
    assert jnp.allclose(seq, seq_ref, atol=5e-2, rtol=5e-2), \
        float(jnp.max(jnp.abs(seq - seq_ref)))

    # --- 4) pooled cls output (cls row is kept in f32 end-to-end: tight check) ---
    pooled = jax.jit(functools.partial(
        transformer_forward, patch_size=patch_size))(x, params)
    pooled = jax.block_until_ready(pooled)
    pooled_ref = _reference_forward(x, params, patch_size=patch_size)
    assert pooled.shape == (B, dim), pooled.shape
    assert jnp.allclose(pooled, pooled_ref, atol=1e-3, rtol=1e-3), \
        float(jnp.max(jnp.abs(pooled - pooled_ref)))

    print("KERNEL_OK")
</pallas_src>

<mosaic_0001>
module attributes {stable_mosaic.version = 11 : i64} {
  func.func @_stem_matmul_kernel(%arg0: i32, %arg1: memref<32x192xf32, #tpu.memory_space<vmem>>, %arg2: memref<192x128xf32, #tpu.memory_space<vmem>>, %arg3: memref<1x128xf32, #tpu.memory_space<vmem>>, %arg4: memref<32x128xf32, #tpu.memory_space<vmem>>) attributes {dimension_semantics = [#tpu.dimension_semantics<parallel>], iteration_bounds = array<i64: 2>, scalar_prefetch = 0 : i64, scratch_operands = 0 : i64, tpu.core_type = #tpu.core_type<tc>, window_params = [{transform_indices = @transform_0, window_bounds = array<i64: 32, 192>}, {pipeline_mode = #tpu.pipeline_mode<synchronous>, transform_indices = @transform_1, window_bounds = array<i64: 192, 128>}, {pipeline_mode = #tpu.pipeline_mode<synchronous>, transform_indices = @transform_2, window_bounds = array<i64: 1, 128>}, {transform_indices = @transform_3, window_bounds = array<i64: 32, 128>}]} {
    %c0 = arith.constant 0 : index
    %c0_0 = arith.constant 0 : index
    %0 = vector.load %arg1[%c0, %c0_0] : memref<32x192xf32, #tpu.memory_space<vmem>>, vector<32x192xf32>
    %c0_1 = arith.constant 0 : index
    %c0_2 = arith.constant 0 : index
    %1 = vector.load %arg2[%c0_1, %c0_2] : memref<192x128xf32, #tpu.memory_space<vmem>>, vector<192x128xf32>
    %cst = arith.constant dense<0.000000e+00> : vector<32x128xf32>
    %2 = tpu.matmul %0, %1, %cst {dimension_numbers = #tpu.dot_dimension_numbers<[1], [0], [0], [1], [0, 0, 1, 1], [], []>} : vector<32x192xf32>, vector<192x128xf32>, vector<32x128xf32> -> vector<32x128xf32>
    %c0_3 = arith.constant 0 : index
    %c0_4 = arith.constant 0 : index
    %3 = vector.load %arg3[%c0_3, %c0_4] : memref<1x128xf32, #tpu.memory_space<vmem>>, vector<1x128xf32>
    %4 = vector.broadcast %3 : vector<1x128xf32> to vector<32x128xf32>
    %5 = arith.addf %2, %4 : vector<32x128xf32>
    %c0_5 = arith.constant 0 : index
    %c0_6 = arith.constant 0 : index
    %6 = vector.load %arg4[%c0_5, %c0_6] : memref<32x128xf32, #tpu.memory_space<vmem>>, vector<32x128xf32>
    tpu.vector_store %arg4[%c0_5, %c0_6], %5 {strides = array<i32>} : memref<32x128xf32, #tpu.memory_space<vmem>>, vector<32x128xf32>,
    return
  }
  func.func @transform_0(%arg0: i32) -> (i32, i32) {
    %c0_i32 = arith.constant 0 : i32
    %c0_i32_0 = arith.constant 0 : i32
    return %arg0, %c0_i32 : i32, i32
  }
  func.func @transform_1(%arg0: i32) -> (i32, i32) {
    %c0_i32 = arith.constant 0 : i32
    %c0_i32_0 = arith.constant 0 : i32
    %c0_i32_1 = arith.constant 0 : i32
    return %c0_i32, %c0_i32_0 : i32, i32
  }
  func.func @transform_2(%arg0: i32) -> (i32, i32) {
    %c0_i32 = arith.constant 0 : i32
    %c0_i32_0 = arith.constant 0 : i32
    %c0_i32_1 = arith.constant 0 : i32
    return %c0_i32, %c0_i32_0 : i32, i32
  }
  func.func @transform_3(%arg0: i32) -> (i32, i32) {
    %c0_i32 = arith.constant 0 : i32
    %c0_i32_0 = arith.constant 0 : i32
    return %arg0, %c0_i32 : i32, i32
  }
}

</mosaic_0001>

<llo_original>
// kernel: patch_embed_stem.2
$region0: #{patch_embed_stem.2}
  #allocation0 [shape = 'u32[]', space=smem, size = 0x4, offset = 0x4, fixed_abs, tag = 'smem constant byte address 0x4 - core index']
  #allocation1 [shape = 'u32[144,128]{1,0:T(1,128)}', space=vmem, size = 0x12000, scoped, tag = 'internal scratch']
  #allocation2 [shape = 'u32[2048]{0}', space=vmem, size = 0x2000, scoped, tag = 'scoped memory for patch_embed_stem.2']
  #allocation3 [shape = 'u32[2048]{0}', space=vmem, size = 0x2000, scoped, tag = 'scoped memory for patch_embed_stem.2']
  #allocation4 [shape = 'u32[2048]{0}', space=vmem, size = 0x2000, scoped, tag = 'scoped memory for patch_embed_stem.2']
  #allocation5 [shape = 'u32[2048]{0}', space=vmem, size = 0x2000, scoped, tag = 'scoped memory for patch_embed_stem.2']
  #allocation6 [shape = 'u32[2048]{0}', space=vmem, size = 0x2000, scoped, tag = 'scoped memory for patch_embed_stem.2']
  #allocation7 [shape = 'u32[2048]{0}', space=vmem, size = 0x2000, scoped, tag = 'scoped memory for patch_embed_stem.2']
  #allocation8 [shape = 'u32[2048]{0}', space=vmem, size = 0x2000, scoped, tag = 'scoped memory for patch_embed_stem.2']
  #allocation9 [shape = 'u32[2048]{0}', space=vmem, size = 0x2000, scoped, tag = 'scoped memory for patch_embed_stem.2']
  #allocation10 [shape = 'u32[2048]{0}', space=vmem, size = 0x2000, scoped, tag = 'scoped memory for patch_embed_stem.2']
  #allocation11 [shape = 'u32[2048]{0}', space=vmem, size = 0x2000, scoped, tag = 'scoped memory for patch_embed_stem.2']
  %s0 = inlined_call_operand.vmem [shape: f32[64,192], index: 0, kind: input, shape index: {}]
  %s1 = inlined_call_operand.vmem [shape: f32[192,32], index: 1, kind: input, shape index: {}]
  %s2 = inlined_call_operand.<no memory space> [shape: f32[], index: 2, kind: input, shape index: {}]
  %s3 = inlined_call_operand.vmem [shape: f32[32], index: 3, kind: input, shape index: {}]
  %s4 = inlined_call_operand.hbm [shape: f32[64,128], index: 4, kind: output, shape index: {}]
  %s5 = sld [smem:[#allocation0]]
  $region45: #{patch_embed_stem.2} parent=0
    _
  %s7 = ssub.s32 1, %s5
  %s8 = scalar_select 0, %s7, %s5
  %v9 = vstv %s2
  %v10 = vstv %s2
  $region1: #{patch_embed_stem.2} parent=0
    #allocation12 [shape = 'u8[32768]{0}', space=vmem, size = 0x8000, scoped, tag = 'output window, operand 0']
    #allocation13 [shape = 's32[2]{0}', space=sflag, size = 0x8, scoped, tag = 'scoped memory for patch_embed_stem.2']
    %11 = vsyncpa [#allocation13], 0
    %s12 = scalar_lea.sflag [#allocation13], 1
    %13 = vsyncpa %s12, 0
    loop: start=0, step=1, limit=4
    $region2: #{patch_embed_stem.2} parent=1 // loop_pre_header
      _
    $region3: #{patch_embed_stem.2} parent=1 // loop_header
      %s15 = sphi 0, %s19
      %p16 = scmp.ge.s32.totalorder %s15, 4
      %s25 = sphi 0, %s27
      %s28 = sphi 0, %s25
      %s29 = sphi 0, %s28
      %s45 = sphi 0, %s29
      %s49 = sphi 0, %s49
      %s51 = sphi 0, %s49
      %s52 = sphi 0, %s51
      %s66 = sphi 0, %s52
      %s70 = sphi 0, %s70
      %s72 = sphi 0, %s70
      %s73 = sphi 0, %s72
      %s87 = sphi 0, %s73
      %s93 = sphi 0, %s95
      %s96 = sphi 0, %s93
      %s97 = sphi 0, %s96
      %s113 = sphi 0, %s97
    $region4: #{patch_embed_stem.2} parent=1 // loop_header_branch
      %18 = sbr.rel (%p16) target = $region8
    $region5: #{patch_embed_stem.2} parent=1 // loop_body
      %s20 = ssub.s32 %s15, 1
      %s21 = ssub.s32 %s15, 2
      %s22 = sadd.s32 %s15, 1
      %s23 = ssub.s32 %s15, %s22
      %p24 = scmp.eq.s32.totalorder %s23, 0
      %s26 = sadd.s32 %s25, 1
      %s27 = scalar_select %p24, %s25, %s26
      %p30 = pneg %p24
      %p31 = scmp.eq.s32.totalorder %s15, 1
      %p32 = por %p30, %p31
      %p33 = scmp.ne.s32.totalorder %s25, %s28
      %p34 = scmp.eq.s32.totalorder %s15, 0
      %p35 = por %p33, %p34
      %p36 = scmp.ne.s32.totalorder %s25, %s28
      %p37 = scmp.eq.s32.totalorder %s20, 1
      %p38 = por %p36, %p37
      %p39 = scmp.ne.s32.totalorder %s28, %s29
      %p40 = scmp.eq.s32.totalorder %s20, 0
      %p41 = por %p39, %p40
      %p42 = scmp.ne.s32.totalorder %s28, %s29
      %p43 = scmp.eq.s32.totalorder %s21, 1
      %p44 = por %p42, %p43
      %p46 = scmp.ne.s32.totalorder %s29, %s45
      %p47 = scmp.eq.s32.totalorder %s21, 0
      %p48 = por %p46, %p47
      %s50 = sadd.s32 %s49, 1
      %p53 = scmp.eq.s32.totalorder %s15, 1
      %p54 = scmp.ne.s32.totalorder %s49, %s51
      %p55 = scmp.eq.s32.totalorder %s15, 0
      %p56 = por %p54, %p55
      %p57 = scmp.ne.s32.totalorder %s49, %s51
      %p58 = scmp.eq.s32.totalorder %s20, 1
      %p59 = por %p57, %p58
      %p60 = scmp.ne.s32.totalorder %s51, %s52
      %p61 = scmp.eq.s32.totalorder %s20, 0
      %p62 = por %p60, %p61
      %p63 = scmp.ne.s32.totalorder %s51, %s52
      %p64 = scmp.eq.s32.totalorder %s21, 1
      %p65 = por %p63, %p64
      %p67 = scmp.ne.s32.totalorder %s52, %s66
      %p68 = scmp.eq.s32.totalorder %s21, 0
      %p69 = por %p67, %p68
      %s71 = sadd.s32 %s70, 1
      %p74 = scmp.eq.s32.totalorder %s15, 1
      %p75 = scmp.ne.s32.totalorder %s70, %s72
      %p76 = scmp.eq.s32.totalorder %s15, 0
      %p77 = por %p75, %p76
      %p78 = scmp.ne.s32.totalorder %s70, %s72
      %p79 = scmp.eq.s32.totalorder %s20, 1
      %p80 = por %p78, %p79
      %p81 = scmp.ne.s32.totalorder %s72, %s73
      %p82 = scmp.eq.s32.totalorder %s20, 0
      %p83 = por %p81, %p82
      %p84 = scmp.ne.s32.totalorder %s72, %s73
      %p85 = scmp.eq.s32.totalorder %s21, 1
      %p86 = por %p84, %p85
      %p88 = scmp.ne.s32.totalorder %s73, %s87
      %p89 = scmp.eq.s32.totalorder %s21, 0
      %p90 = por %p88, %p89
      %s91 = ssub.s32 %s15, %s22
      %p92 = scmp.eq.s32.totalorder %s91, 0
      %s94 = sadd.s32 %s93, 1
      %s95 = scalar_select %p92, %s93, %s94
      %p98 = pneg %p92
      %p99 = scmp.eq.s32.totalorder %s15, 1
      %p100 = por %p98, %p99
      %p101 = scmp.ne.s32.totalorder %s93, %s96
      %p102 = scmp.eq.s32.totalorder %s15, 0
      %p103 = por %p101, %p102
      %p104 = scmp.ne.s32.totalorder %s93, %s96
      %p105 = scmp.eq.s32.totalorder %s20, 1
      %p106 = por %p104, %p105
      %p107 = scmp.ne.s32.totalorder %s96, %s97
      %p108 = scmp.eq.s32.totalorder %s20, 0
      %p109 = por %p107, %p108
      %p110 = scmp.ne.s32.totalorder %s96, %s97
      %p111 = scmp.eq.s32.totalorder %s21, 1
      %p112 = por %p110, %p111
      %p114 = scmp.ne.s32.totalorder %s97, %s113
      %p115 = scmp.eq.s32.totalorder %s21, 0
      %p116 = por %p114, %p115
      %p117 = scmp.le.s32.totalorder 1, %s15
      %p118 = scmp.lt.s32.totalorder %s15, 3
      %p119 = pnand %p117, %p118
      %p120 = pneg %p119
      // Predicated region
      $region9: #{patch_embed_stem.2} parent=5 // pred_check
        _
      $region10: #{patch_embed_stem.2} parent=5 // pred_check_branch
        %122 = sbr.rel (%p119) target = $region12
      $region11: #{patch_embed_stem.2} parent=5 // pred_region
        %s123 = ssub.s32 %s15, 1
        // Predicated region
        $region13: #{patch_embed_stem.2} parent=11 // pred_check
          %p124 = pneg %p62
        $region14: #{patch_embed_stem.2} parent=11 // pred_check_branch
          %126 = sbr.rel (%p124) target = $region16
        $region15: #{patch_embed_stem.2} parent=11 // pred_region
          _
        $region16: #{patch_embed_stem.2} parent=11 // pred_fallthru
          _
        // Predicated region
        $region17: #{patch_embed_stem.2} parent=11 // pred_check
          %p127 = pneg %p83
        $region18: #{patch_embed_stem.2} parent=11 // pred_check_branch
          %129 = sbr.rel (%p127) target = $region20
        $region19: #{patch_embed_stem.2} parent=11 // pred_region
          _
        $region20: #{patch_embed_stem.2} parent=11 // pred_fallthru
          _
      $region12: #{patch_embed_stem.2} parent=5 // pred_fallthru
        _
      %p130 = scmp.lt.s32.totalorder %s15, 2
      // Predicated region
      $region21: #{patch_embed_stem.2} parent=5 // pred_check
        %p131 = pneg %p130
      $region22: #{patch_embed_stem.2} parent=5 // pred_check_branch
        %133 = sbr.rel (%p131) target = $region24
      $region23: #{patch_embed_stem.2} parent=5 // pred_region
        // Predicated region
        $region25: #{patch_embed_stem.2} parent=23 // pred_check
          %p134 = pneg %p35
        $region26: #{patch_embed_stem.2} parent=23 // pred_check_branch
          %136 = sbr.rel (%p134) target = $region28
        $region27: #{patch_embed_stem.2} parent=23 // pred_region
          %s137 = smul.u32 4, %s15
          %p138 = scmp.lt.s32.totalorder %s137, 7
          %s139 = scalar_select %p138, %s137, 7
          %s140 = smul.addr %s139, 2
          %s141 = smul.addr %s140, 8
          %s142 = scalar_lea.vmem %s0, %s141
          %s143 = smul.u32 4, %s15
        $region28: #{patch_embed_stem.2} parent=23 // pred_fallthru
          _
      $region24: #{patch_embed_stem.2} parent=5 // pred_fallthru
        _
      %p144 = scmp.le.s32.totalorder 1, %s15
      %p145 = scmp.lt.s32.totalorder %s15, 3
      %p146 = pnand %p144, %p145
      %p147 = pneg %p146
      // Predicated region
      $region29: #{patch_embed_stem.2} parent=5 // pred_check
        _
      $region30: #{patch_embed_stem.2} parent=5 // pred_check_branch
        %149 = sbr.rel (%p146) target = $region32
      $region31: #{patch_embed_stem.2} parent=5 // pred_region
        #allocation14 [shape = 'u8[98304]{0}', space=vmem, size = 0x18000, dematerialized = true, scoped, tag = 'FusionAdapter Buffer %fusion.1 = f32[192,128]{1,0:T(8,128)} fusion(%param_1.3, %param_2.2), kind=kLoop, calls=%fused_computation.2.clone, metadata={op_name="jit(patch_embed_stem)/jit(_pad)/pad" stack_frame_id=12}']
        #allocation15 [shape = 'u8[512]{0}', space=vmem, size = 0x400, dematerialized = true, scoped, tag = 'FusionAdapter Buffer %fusion.2 = f32[1,128]{1,0:T(1,128)} fusion(%param_3.2, %param_2.2), kind=kLoop, calls=%fused_computation.3.clone, metadata={op_name="jit(patch_embed_stem)/reshape" stack_frame_id=14}']
        %s150 = ssub.s32 %s15, 1
        %s151 = smul.u32 4, %s20
        %p152 = scmp.lt.s32.totalorder %s151, 7
        %s153 = scalar_select %p152, %s151, 7
        %s154 = smul.addr %s153, 2
        %s155 = smul.addr %s154, 8
        %s156 = scalar_lea.vmem %s0, %s155
        %p157 = pneg %p41
        %p158 = pneg %p38
        %p159 = pneg %p62
        %p160 = pneg %p59
        %p161 = pneg %p83
        %p162 = pneg %p80
        %p163 = pneg %p109
        %p164 = pneg %p106
        %s165 = sand.u32 %s96, 1
        %s166 = scalar_lea.sflag [#allocation13], %s165
        %s167 = sand.u32 %s96, 1
        %s168 = smul.addr %s167, 32
        %s169 = scalar_lea.vmem [#allocation12], %s168
        %s170 = smul.u32 4, %s20
        %p171 = scmp.lt.s32.totalorder %s170, 7
        %s172 = scalar_select %p171, %s170, 7
        %s173 = smul.addr %s172, 2
        %s174 = smul.addr %s173, 8
        %s175 = scalar_lea.vmem %s0, %s174
        %s176 = smul.u32 4, %s20
        %s177 = smul.u32 4, %s20
        %v178 = vld [vmem:[%s1] sm:$0xff]
        %v179 = vlaneseq
        %v180 = vand.u32 %v179, 127
        %vm182 = vcmp.lt.s32.totalorder %v180, 32
        %v183 = vsel %vm182, %v178, %v9
        %185 = vst [vmem:[#allocation14] sm:$0xff] %v183
        %s186 = scalar_lea.vmem %s1, 8
        %v187 = vld [vmem:[%s186] sm:$0xff]
        %v188 = vlaneseq
        %v189 = vand.u32 %v188, 127
        %vm191 = vcmp.lt.s32.totalorder %v189, 32
        %v192 = vsel %vm191, %v187, %v9
        %s193 = scalar_lea.vmem [#allocation14], 8
        %195 = vst [vmem:[%s193] sm:$0xff] %v192
        %s196 = scalar_lea.vmem %s1, 16
        %v197 = vld [vmem:[%s196] sm:$0xff]
        %v198 = vlaneseq
        %v199 = vand.u32 %v198, 127
        %vm201 = vcmp.lt.s32.totalorder %v199, 32
        %v202 = vsel %vm201, %v197, %v9
        %s203 = scalar_lea.vmem [#allocation14], 16
        %205 = vst [vmem:[%s203] sm:$0xff] %v202
        %s206 = scalar_lea.vmem %s1, 24
        %v207 = vld [vmem:[%s206] sm:$0xff]
        %v208 = vlaneseq
        %v209 = vand.u32 %v208, 127
        %vm211 = vcmp.lt.s32.totalorder %v209, 32
        %v212 = vsel %vm211, %v207, %v9
        %s213 = scalar_lea.vmem [#allocation14], 24
        %215 = vst [vmem:[%s213] sm:$0xff] %v212
        %s216 = scalar_lea.vmem %s1, 32
        %v217 = vld [vmem:[%s216] sm:$0xff]
        %v218 = vlaneseq
        %v219 = vand.u32 %v218, 127
        %vm221 = vcmp.lt.s32.totalorder %v219, 32
        %v222 = vsel %vm221, %v217, %v9
        %s223 = scalar_lea.vmem [#allocation14], 32
        %225 = vst [vmem:[%s223] sm:$0xff] %v222
        %s226 = scalar_lea.vmem %s1, 40
        %v227 = vld [vmem:[%s226] sm:$0xff]
        %v228 = vlaneseq
        %v229 = vand.u32 %v228, 127
        %vm231 = vcmp.lt.s32.totalorder %v229, 32
        %v232 = vsel %vm231, %v227, %v9
        %s233 = scalar_lea.vmem [#allocation14], 40
        %235 = vst [vmem:[%s233] sm:$0xff] %v232
        %s236 = scalar_lea.vmem %s1, 48
        %v237 = vld [vmem:[%s236] sm:$0xff]
        %v238 = vlaneseq
        %v239 = vand.u32 %v238, 127
        %vm241 = vcmp.lt.s32.totalorder %v239, 32
        %v242 = vsel %vm241, %v237, %v9
        %s243 = scalar_lea.vmem [#allocation14], 48
        %245 = vst [vmem:[%s243] sm:$0xff] %v242
        %s246 = scalar_lea.vmem %s1, 56
        %v247 = vld [vmem:[%s246] sm:$0xff]
        %v248 = vlaneseq
        %v249 = vand.u32 %v248, 127
        %vm251 = vcmp.lt.s32.totalorder %v249, 32
        %v252 = vsel %vm251, %v247, %v9
        %s253 = scalar_lea.vmem [#allocation14], 56
        %255 = vst [vmem:[%s253] sm:$0xff] %v252
        %s256 = scalar_lea.vmem %s1, 64
        %v257 = vld [vmem:[%s256] sm:$0xff]
        %v258 = vlaneseq
        %v259 = vand.u32 %v258, 127
        %vm261 = vcmp.lt.s32.totalorder %v259, 32
        %v262 = vsel %vm261, %v257, %v9
        %s263 = scalar_lea.vmem [#allocation14], 64
        %265 = vst [vmem:[%s263] sm:$0xff] %v262
        %s266 = scalar_lea.vmem %s1, 72
        %v267 = vld [vmem:[%s266] sm:$0xff]
        %v268 = vlaneseq
        %v269 = vand.u32 %v268, 127
        %vm271 = vcmp.lt.s32.totalorder %v269, 32
        %v272 = vsel %vm271, %v267, %v9
        %s273 = scalar_lea.vmem [#allocation14], 72
        %275 = vst [vmem:[%s273] sm:$0xff] %v272
        %s276 = scalar_lea.vmem %s1, 80
        %v277 = vld [vmem:[%s276] sm:$0xff]
        %v278 = vlaneseq
        %v279 = vand.u32 %v278, 127
        %vm281 = vcmp.lt.s32.totalorder %v279, 32
        %v282 = vsel %vm281, %v277, %v9
        %s283 = scalar_lea.vmem [#allocation14], 80
        %285 = vst [vmem:[%s283] sm:$0xff] %v282
        %s286 = scalar_lea.vmem %s1, 88
        %v287 = vld [vmem:[%s286] sm:$0xff]
        %v288 = vlaneseq
        %v289 = vand.u32 %v288, 127
        %vm291 = vcmp.lt.s32.totalorder %v289, 32
        %v292 = vsel %vm291, %v287, %v9
        %s293 = scalar_lea.vmem [#allocation14], 88
        %295 = vst [vmem:[%s293] sm:$0xff] %v292
        %s296 = scalar_lea.vmem %s1, 96
        %v297 = vld [vmem:[%s296] sm:$0xff]
        %v298 = vlaneseq
        %v299 = vand.u32 %v298, 127
        %vm301 = vcmp.lt.s32.totalorder %v299, 32
        %v302 = vsel %vm301, %v297, %v9
        %s303 = scalar_lea.vmem [#allocation14], 96
        %305 = vst [vmem:[%s303] sm:$0xff] %v302
        %s306 = scalar_lea.vmem %s1, 104
        %v307 = vld [vmem:[%s306] sm:$0xff]
        %v308 = vlaneseq
        %v309 = vand.u32 %v308, 127
        %vm311 = vcmp.lt.s32.totalorder %v309, 32
        %v312 = vsel %vm311, %v307, %v9
        %s313 = scalar_lea.vmem [#allocation14], 104
        %315 = vst [vmem:[%s313] sm:$0xff] %v312
        %s316 = scalar_lea.vmem %s1, 112
        %v317 = vld [vmem:[%s316] sm:$0xff]
        %v318 = vlaneseq
        %v319 = vand.u32 %v318, 127
        %vm321 = vcmp.lt.s32.totalorder %v319, 32
        %v322 = vsel %vm321, %v317, %v9
        %s323 = scalar_lea.vmem [#allocation14], 112
        %325 = vst [vmem:[%s323] sm:$0xff] %v322
        %s326 = scalar_lea.vmem %s1, 120
        %v327 = vld [vmem:[%s326] sm:$0xff]
        %v328 = vlaneseq
        %v329 = vand.u32 %v328, 127
        %vm331 = vcmp.lt.s32.totalorder %v329, 32
        %v332 = vsel %vm331, %v327, %v9
        %s333 = scalar_lea.vmem [#allocation14], 120
        %335 = vst [vmem:[%s333] sm:$0xff] %v332
        %s336 = scalar_lea.vmem %s1, 128
        %v337 = vld [vmem:[%s336] sm:$0xff]
        %v338 = vlaneseq
        %v339 = vand.u32 %v338, 127
        %vm341 = vcmp.lt.s32.totalorder %v339, 32
        %v342 = vsel %vm341, %v337, %v9
        %s343 = scalar_lea.vmem [#allocation14], 128
        %345 = vst [vmem:[%s343] sm:$0xff] %v342
        %s346 = scalar_lea.vmem %s1, 136
        %v347 = vld [vmem:[%s346] sm:$0xff]
        %v348 = vlaneseq
        %v349 = vand.u32 %v348, 127
        %vm351 = vcmp.lt.s32.totalorder %v349, 32
        %v352 = vsel %vm351, %v347, %v9
        %s353 = scalar_lea.vmem [#allocation14], 136
        %355 = vst [vmem:[%s353] sm:$0xff] %v352
        %s356 = scalar_lea.vmem %s1, 144
        %v357 = vld [vmem:[%s356] sm:$0xff]
        %v358 = vlaneseq
        %v359 = vand.u32 %v358, 127
        %vm361 = vcmp.lt.s32.totalorder %v359, 32
        %v362 = vsel %vm361, %v357, %v9
        %s363 = scalar_lea.vmem [#allocation14], 144
        %365 = vst [vmem:[%s363] sm:$0xff] %v362
        %s366 = scalar_lea.vmem %s1, 152
        %v367 = vld [vmem:[%s366] sm:$0xff]
        %v368 = vlaneseq
        %v369 = vand.u32 %v368, 127
        %vm371 = vcmp.lt.s32.totalorder %v369, 32
        %v372 = vsel %vm371, %v367, %v9
        %s373 = scalar_lea.vmem [#allocation14], 152
        %375 = vst [vmem:[%s373] sm:$0xff] %v372
        %s376 = scalar_lea.vmem %s1, 160
        %v377 = vld [vmem:[%s376] sm:$0xff]
        %v378 = vlaneseq
        %v379 = vand.u32 %v378, 127
        %vm381 = vcmp.lt.s32.totalorder %v379, 32
        %v382 = vsel %vm381, %v377, %v9
        %s383 = scalar_lea.vmem [#allocation14], 160
        %385 = vst [vmem:[%s383] sm:$0xff] %v382
        %s386 = scalar_lea.vmem %s1, 168
        %v387 = vld [vmem:[%s386] sm:$0xff]
        %v388 = vlaneseq
        %v389 = vand.u32 %v388, 127
        %vm391 = vcmp.lt.s32.totalorder %v389, 32
        %v392 = vsel %vm391, %v387, %v9
        %s393 = scalar_lea.vmem [#allocation14], 168
        %395 = vst [vmem:[%s393] sm:$0xff] %v392
        %s396 = scalar_lea.vmem %s1, 176
        %v397 = vld [vmem:[%s396] sm:$0xff]
        %v398 = vlaneseq
        %v399 = vand.u32 %v398, 127
        %vm401 = vcmp.lt.s32.totalorder %v399, 32
        %v402 = vsel %vm401, %v397, %v9
        %s403 = scalar_lea.vmem [#allocation14], 176
        %405 = vst [vmem:[%s403] sm:$0xff] %v402
        %s406 = scalar_lea.vmem %s1, 184
        %v407 = vld [vmem:[%s406] sm:$0xff]
        %v408 = vlaneseq
        %v409 = vand.u32 %v408, 127
        %vm411 = vcmp.lt.s32.totalorder %v409, 32
        %v412 = vsel %vm411, %v407, %v9
        %s413 = scalar_lea.vmem [#allocation14], 184
        %415 = vst [vmem:[%s413] sm:$0xff] %v412
        %v416 = vld [vmem:[%s3] sm:$0x1]
        %v417 = vlaneseq
        %vm419 = vcmp.lt.s32.totalorder %v417, 32
        %v420 = vsel %vm419, %v416, %v10
        %422 = vst [vmem:[#allocation15] sm:$0x1] %v420
        %v423 = vld [vmem:[%s175] sm:$0xff]
        %v424 = vld [vmem:[%s175 + $0x8] sm:$0xff]
        %v425 = vld [vmem:[%s175 + $0x10] sm:$0xff]
        %v426 = vld [vmem:[%s175 + $0x18] sm:$0xff]
        %v427 = vld [vmem:[%s175 + $0x20] sm:$0xff]
        %v428 = vld [vmem:[%s175 + $0x28] sm:$0xff]
        %v429 = vld [vmem:[%s175 + $0x30] sm:$0xff]
        %v430 = vld [vmem:[%s175 + $0x38] sm:$0xff]
        %v431 = vld [vmem:[#allocation14] sm:$0xff]
        %v432 = vld [vmem:[#allocation14 + $0x8] sm:$0xff]
        %v433 = vld [vmem:[#allocation14 + $0x10] sm:$0xff]
        %v434 = vld [vmem:[#allocation14 + $0x18] sm:$0xff]
        %v435 = vld [vmem:[#allocation14 + $0x20] sm:$0xff]
        %v436 = vld [vmem:[#allocation14 + $0x28] sm:$0xff]
        %v437 = vld [vmem:[#allocation14 + $0x30] sm:$0xff]
        %v438 = vld [vmem:[#allocation14 + $0x38] sm:$0xff]
        %v439 = vld [vmem:[#allocation14 + $0x40] sm:$0xff]
        %v440 = vld [vmem:[#allocation14 + $0x48] sm:$0xff]
        %v441 = vld [vmem:[#allocation14 + $0x50] sm:$0xff]
        %v442 = vld [vmem:[#allocation14 + $0x58] sm:$0xff]
        %v443 = vld [vmem:[#allocation14 + $0x60] sm:$0xff]
        %v444 = vld [vmem:[#allocation14 + $0x68] sm:$0xff]
        %v445 = vld [vmem:[#allocation14 + $0x70] sm:$0xff]
        %v446 = vld [vmem:[#allocation14 + $0x78] sm:$0xff]
        %v447 = vld [vmem:[#allocation14 + $0x80] sm:$0xff]
        %v448 = vld [vmem:[#allocation14 + $0x88] sm:$0xff]
        %v449 = vld [vmem:[#allocation14 + $0x90] sm:$0xff]
        %v450 = vld [vmem:[#allocation14 + $0x98] sm:$0xff]
        %v451 = vld [vmem:[#allocation14 + $0xa0] sm:$0xff]
        %v452 = vld [vmem:[#allocation14 + $0xa8] sm:$0xff]
        %v453 = vld [vmem:[#allocation14 + $0xb0] sm:$0xff]
        %v454 = vld [vmem:[#allocation14 + $0xb8] sm:$0xff]
        %v455 = vld [vmem:[#allocation15] sm:$0x1]
        %v457 = vlaneseq
        %v458 = vshrl.u32 %v457, 7
        %v459 = vsub.s32 0, %v458
        %v460 = vrot.slane %v455, %v459
        %vm462 = vcmask 523264
        %v464 = vsel %vm462, %v424, 0
        %v467 = vsel %vm462, %v426, 0
        %v470 = vsel %vm462, %v428, 0
        %v473 = vsel %vm462, %v430, 0
        %475 = vmatprep.subr.mxu0 0.0
        %476 = vmatpush1.msra.mxu0 %v431
        %477 = vmatprep.subr.mxu0 0.0
        %478 = vmatpush1.msra.mxu0 %v432
        %479 = vmatprep.subr.mxu0 0.0
        %480 = vmatpush1.msra.mxu0 %v433
        %481 = vmatprep.subr.mxu0 0.0
        %482 = vmatpush1.msra.mxu0 %v434
        %483 = vmatprep.subr.mxu0 0.0
        %484 = vmatpush1.msra.mxu0 %v435
        %485 = vmatprep.subr.mxu0 0.0
        %486 = vmatpush1.msra.mxu0 %v436
        %487 = vmatprep.subr.mxu0 0.0
        %488 = vmatpush1.msra.mxu0 %v437
        %489 = vmatprep.subr.mxu0 0.0
        %490 = vmatpush1.msra.mxu0 %v438
        %491 = vmatprep.subr.mxu0 0.0
        %492 = vmatpush1.msra.mxu0 %v439
        %493 = vmatprep.subr.mxu0 0.0
        %494 = vmatpush1.msra.mxu0 %v440
        %495 = vmatprep.subr.mxu0 0.0
        %496 = vmatpush1.msra.mxu0 %v441
        %497 = vmatprep.subr.mxu0 0.0
        %498 = vmatpush1.msra.mxu0 %v442
        %499 = vmatprep.subr.mxu0 0.0
        %500 = vmatpush1.msra.mxu0 %v443
        %501 = vmatprep.subr.mxu0 0.0
        %502 = vmatpush1.msra.mxu0 %v444
        %503 = vmatprep.subr.mxu0 0.0
        %504 = vmatpush1.msra.mxu0 %v445
        %505 = vmatprep.subr.mxu0 0.0
        %506 = vmatpush1.msra.mxu0 %v446
        %507 = vmatprep.subr.mxu0 0.0
        %508 = vmatpush1.msra.mxu0 %v447
        %509 = vmatprep.subr.mxu0 0.0
        %510 = vmatpush1.msra.mxu0 %v448
        %511 = vmatprep.subr.mxu0 0.0
        %512 = vmatpush1.msra.mxu0 %v449
        %513 = vmatprep.subr.mxu0 0.0
        %514 = vmatpush1.msra.mxu0 %v450
        %515 = vmatprep.subr.mxu0 0.0
        %516 = vmatpush1.msra.mxu0 %v451
        %517 = vmatprep.subr.mxu0 0.0
        %518 = vmatpush1.msra.mxu0 %v452
        %519 = vmatprep.subr.mxu0 0.0
        %520 = vmatpush1.msra.mxu0 %v453
        %521 = vmatprep.subr.mxu0 0.0
        %522 = vmatpush1.msra.mxu0 %v454
        %523 = vmatprep.subr.mxu0 0.0
        %524 = vmatpush1.msra.mxu0 0.0
        %525 = vmatprep.subr.mxu0 0.0
        %526 = vmatpush1.msra.mxu0 0.0
        %527 = vmatprep.subr.mxu0 0.0
        %528 = vmatpush1.msra.mxu0 0.0
        %529 = vmatprep.subr.mxu0 0.0
        %530 = vmatpush1.msra.mxu0 0.0
        %531 = vmatprep.subr.mxu0 0.0
        %532 = vmatpush1.msra.mxu0 0.0
        %533 = vmatprep.subr.mxu0 0.0
        %534 = vmatpush1.msra.mxu0 0.0
        %535 = vmatprep.subr.mxu0 0.0
        %536 = vmatpush1.msra.mxu0 0.0
        %537 = vmatprep.subr.mxu0 0.0
        %538 = vmatpush1.msra.mxu0 0.0
        %539 = vmatprep.mubr.f32.mxu0 %v464
        %540 = vmatmul.mubr.f32.gmra.mrb[0].mxu0 %v423
        %v541 = vpop.f32.mrb[0].mxu0
        %v542 = vadd.f32 %v460, %v541
        %v543 = vpop.f32.mrb[0].mxu0
        %544 = vmatprep.mubr.f32.mxu0 %v467
        %545 = vmatmul.mubr.f32.gmra.mrb[0].mxu0 %v425
        %v546 = vpop.f32.mrb[0].mxu0
        %v547 = vadd.f32 %v460, %v546
        %v548 = vpop.f32.mrb[0].mxu0
        %549 = vmatprep.mubr.f32.mxu0 %v470
        %550 = vmatmul.mubr.f32.gmra.mrb[0].mxu0 %v427
        %v551 = vpop.f32.mrb[0].mxu0
        %v552 = vadd.f32 %v460, %v551
        %v553 = vpop.f32.mrb[0].mxu0
        %554 = vmatprep.mubr.f32.mxu0 %v473
        %555 = vmatmul.mubr.f32.gmra.mrb[0].mxu0 %v429
        %v556 = vpop.f32.mrb[0].mxu0
        %v557 = vadd.f32 %v460, %v556
        %v558 = vpop.f32.mrb[0].mxu0
        %559 = vdwg.mxu0
        %560 = vst [vmem:[%s169] sm:$0xff] %v542
        %561 = vst [vmem:[%s169 + $0x8] sm:$0xff] %v547
        %562 = vst [vmem:[%s169 + $0x10] sm:$0xff] %v552
        %563 = vst [vmem:[%s169 + $0x18] sm:$0xff] %v557
        %s564 = sand.u32 %s96, 1
        %s565 = scalar_lea.sflag [#allocation13], %s564
        %s566 = sand.u32 %s96, 1
        %s567 = smul.addr %s566, 32
        %s568 = scalar_lea.vmem [#allocation12], %s567
        // Predicated region
        $region33: #{patch_embed_stem.2} parent=31 // pred_check
          %p569 = pneg %p106
        $region34: #{patch_embed_stem.2} parent=31 // pred_check_branch
          %571 = sbr.rel (%p569) target = $region36
        $region35: #{patch_embed_stem.2} parent=31 // pred_region
          %s572 = smul.u32 4, %s20
          %s574 = ssub.s32 512, 512
          %575 = vsyncadd %s565, %s574
          %s576 = smul.addr %s572, 128
          %s577 = scalar_lea.hbm %s4, %s576
          %s578 = sshll.u32 %s568, 4
          %s579 = int_to_ptr.vmem [resolvable:$true] %s578
          %584 = dma.vmem_to_hbm [thread:$0]  %s579, 512, %s577, %s565, 128, 128, 8
        $region36: #{patch_embed_stem.2} parent=31 // pred_fallthru
          _
      $region32: #{patch_embed_stem.2} parent=5 // pred_fallthru
        _
      %p585 = scmp.le.s32.totalorder 2, %s15
      // Predicated region
      $region37: #{patch_embed_stem.2} parent=5 // pred_check
        %p586 = pneg %p585
      $region38: #{patch_embed_stem.2} parent=5 // pred_check_branch
        %588 = sbr.rel (%p586) target = $region40
      $region39: #{patch_embed_stem.2} parent=5 // pred_region
        %s589 = ssub.s32 %s15, 2
        // Predicated region
        $region41: #{patch_embed_stem.2} parent=39 // pred_check
          %p590 = pneg %p112
        $region42: #{patch_embed_stem.2} parent=39 // pred_check_branch
          %592 = sbr.rel (%p590) target = $region44
        $region43: #{patch_embed_stem.2} parent=39 // pred_region
          %s593 = sand.u32 %s97, 1
          %s594 = scalar_lea.sflag [#allocation13], %s593
          %s595 = sand.u32 %s97, 1
          %s596 = smul.addr %s595, 32
          %s597 = scalar_lea.vmem [#allocation12], %s596
          %598 = dma.done %s594, 512
        $region44: #{patch_embed_stem.2} parent=39 // pred_fallthru
          _
      $region40: #{patch_embed_stem.2} parent=5 // pred_fallthru
        _
    $region6: #{patch_embed_stem.2} parent=1 // loop_footer
      %s19 = sadd.s32 1, %s15
    $region7: #{patch_embed_stem.2} parent=1 // loop_footer_branch
      %14 = sbr.rel target = $region3
    $region8: #{patch_embed_stem.2} parent=1 // loop_exit
      _
    %599 = vsyncpa [#allocation13], 1
    %s600 = scalar_lea.sflag [#allocation13], 1
    %601 = vsyncpa %s600, 1

</llo_original>
